<compile_context>
chip_gen: v6e
topology: v6e:2x2x1
jax: 0.10.0
libtpu: 0.0.40
codegen_flags: <defaults>
</compile_context>

<pallas_src>
import numpy as np
import jax
import jax.numpy as jnp
from jax import lax
from jax.experimental import pallas as pl
from jax.experimental.pallas import tpu as pltpu


def _l2pool_kernel(x_ref, o_ref):
    # x_ref / o_ref: (1, TC, H, W) NCHW block; W -> lanes, H -> sublanes.
    _, TC, H, W = x_ref.shape

    x = x_ref[0].astype(jnp.float32)            # (TC, H, W); square in f32
    x2 = x * x

    # ---- vertical [1, 2, 1] pass: sublane rolls (XLU) + zero-pad border mask
    row = lax.broadcasted_iota(jnp.int32, (TC, H, W), 1)
    up = pltpu.roll(x2, shift=1, axis=1)        # x2[h-1] (wraps at h == 0)
    dn = pltpu.roll(x2, shift=H - 1, axis=1)    # x2[h+1] (wraps at h == H-1)
    v = x2 + x2
    v = v + jnp.where(row > 0, up, 0.0)
    v = v + jnp.where(row < H - 1, dn, 0.0)

    # ---- horizontal [1, 2, 1] pass: lane rolls (XLU) + zero-pad border mask
    col = lax.broadcasted_iota(jnp.int32, (TC, H, W), 2)
    lf = pltpu.roll(v, shift=1, axis=2)         # v[:, :, w-1] (wraps at w == 0)
    rt = pltpu.roll(v, shift=W - 1, axis=2)     # v[:, :, w+1] (wraps at w == W-1)
    acc = v + v
    acc = acc + jnp.where(col > 0, lf, 0.0)
    acc = acc + jnp.where(col < W - 1, rt, 0.0)

    # normalized hanning(5)[1:-1] outer product == ([1,2,1] x [1,2,1]) / 16
    o_ref[0] = jnp.sqrt(acc * (1.0 / 16.0) + 1e-12).astype(o_ref.dtype)


def _pick_channel_tile(N, C, H, W, budget_bytes, min_grid_steps=4):
    """Channel tile: largest divisor of C whose f32 (TC, H, W) working tile
    fits the block budget, preferring tiles that leave at least
    `min_grid_steps` total grid steps (double-buffering + megacore)."""
    fits = [d for d in range(1, C + 1)
            if C % d == 0 and d * H * W * 4 <= budget_bytes]
    if not fits:
        return 1
    for d in sorted(fits, reverse=True):
        if N * (C // d) >= min_grid_steps:
            return d
    return max(fits)   # problem too small for min_grid_steps; take biggest tile


def l2pooling(x_nchw, *, tile_budget_bytes=1 << 20):
    """L2pooling forward (filter_size=5, stride=1): NCHW in -> NCHW out."""
    N, C, H, W = x_nchw.shape
    TC = _pick_channel_tile(N, C, H, W, tile_budget_bytes)

    return pl.pallas_call(
        _l2pool_kernel,
        out_shape=jax.ShapeDtypeStruct((N, C, H, W), x_nchw.dtype),
        grid_spec=pltpu.PrefetchScalarGridSpec(
            num_scalar_prefetch=0,
            grid=(N, C // TC),
            in_specs=[pl.BlockSpec((1, TC, H, W), lambda n, c: (n, c, 0, 0))],
            out_specs=pl.BlockSpec((1, TC, H, W), lambda n, c: (n, c, 0, 0)),
        ),
        compiler_params=pltpu.CompilerParams(
            dimension_semantics=("parallel", "parallel"),
            # Explicit budget: with tile_budget_bytes <= 1 MiB, double-buffered
            # in + out + f32 temporaries stay far below this; 32 MiB is safe on
            # v5e / v6e / v7x alike.
            vmem_limit_bytes=32 * 1024 * 1024,
        ),
    )(x_nchw)


def _reference_l2pooling(x_nchw, filter_size=5):
    # Plain-JAX reference built exactly like the PyTorch module (np.hanning),
    # validating that the baked-in [1,2,1]/16 weights match the module.
    C = x_nchw.shape[1]
    a = np.hanning(filter_size)[1:-1]
    g = a[:, None] * a[None, :]
    g = g / g.sum()
    w = jnp.asarray(np.broadcast_to(g[None, None], (C, 1, 3, 3)),
                    dtype=jnp.float32)
    out = lax.conv_general_dilated(
        x_nchw.astype(jnp.float32) ** 2, w,
        window_strides=(1, 1), padding=((1, 1), (1, 1)),
        dimension_numbers=("NCHW", "OIHW", "NCHW"),
        feature_group_count=C)
    return jnp.sqrt(out + 1e-12)


if __name__ == "__main__":
    key = jax.random.PRNGKey(0)
    N, C, H, W = 2, 4, 16, 16
    x = jax.random.normal(key, (N, C, H, W), dtype=jnp.float32)

    y = jax.block_until_ready(l2pooling(x))

    y_ref = _reference_l2pooling(x)
    assert y.shape == (N, C, H, W)
    np.testing.assert_allclose(np.asarray(y), np.asarray(y_ref),
                               rtol=1e-5, atol=1e-5)
    print("KERNEL_OK")
</pallas_src>

<mosaic_0001>
module attributes {stable_mosaic.version = 11 : i64} {
  func.func @_l2pool_kernel(%arg0: i32, %arg1: i32, %arg2: memref<1x2x16x16xf32, #tpu.memory_space<vmem>>, %arg3: memref<1x2x16x16xf32, #tpu.memory_space<vmem>>) attributes {dimension_semantics = [#tpu.dimension_semantics<parallel>, #tpu.dimension_semantics<parallel>], iteration_bounds = array<i64: 2, 2>, scalar_prefetch = 0 : i64, scratch_operands = 0 : i64, tpu.core_type = #tpu.core_type<tc>, window_params = [{transform_indices = @transform_0, window_bounds = array<i64: 1, 2, 16, 16>}, {transform_indices = @transform_1, window_bounds = array<i64: 1, 2, 16, 16>}]} {
    %c0 = arith.constant 0 : index
    %c0_0 = arith.constant 0 : index
    %c0_1 = arith.constant 0 : index
    %c0_2 = arith.constant 0 : index
    %0 = vector.load %arg2[%c0, %c0_0, %c0_1, %c0_2] : memref<1x2x16x16xf32, #tpu.memory_space<vmem>>, vector<1x2x16x16xf32>
    %1 = vector.shape_cast %0 : vector<1x2x16x16xf32> to vector<2x16x16xf32>
    %2 = arith.mulf %1, %1 : vector<2x16x16xf32>
    %3 = tpu.iota {dimensions = array<i32: 1>} : vector<2x16x16xi32>
    %c1_i32 = arith.constant 1 : i32
    %4 = tpu.dynamic_rotate %2 by %c1_i32 dim 1 : vector<2x16x16xf32>, i32 -> vector<2x16x16xf32>
    %c15_i32 = arith.constant 15 : i32
    %5 = tpu.dynamic_rotate %2 by %c15_i32 dim 1 : vector<2x16x16xf32>, i32 -> vector<2x16x16xf32>
    %6 = arith.addf %2, %2 : vector<2x16x16xf32>
    %c0_i32 = arith.constant 0 : i32
    %7 = vector.broadcast %c0_i32 : i32 to vector<2x16x16xi32>
    %8 = arith.cmpi sgt, %3, %7 : vector<2x16x16xi32>
    %cst = arith.constant 0.000000e+00 : f32
    %9 = vector.broadcast %cst : f32 to vector<2x16x16xf32>
    %10 = arith.select %8, %4, %9 : vector<2x16x16xi1>, vector<2x16x16xf32>
    %11 = arith.addf %6, %10 : vector<2x16x16xf32>
    %c15_i32_3 = arith.constant 15 : i32
    %12 = vector.broadcast %c15_i32_3 : i32 to vector<2x16x16xi32>
    %13 = arith.cmpi slt, %3, %12 : vector<2x16x16xi32>
    %cst_4 = arith.constant 0.000000e+00 : f32
    %14 = vector.broadcast %cst_4 : f32 to vector<2x16x16xf32>
    %15 = arith.select %13, %5, %14 : vector<2x16x16xi1>, vector<2x16x16xf32>
    %16 = arith.addf %11, %15 : vector<2x16x16xf32>
    %17 = tpu.iota {dimensions = array<i32: 2>} : vector<2x16x16xi32>
    %c1_i32_5 = arith.constant 1 : i32
    %18 = tpu.dynamic_rotate %16 by %c1_i32_5 dim 2 : vector<2x16x16xf32>, i32 -> vector<2x16x16xf32>
    %c15_i32_6 = arith.constant 15 : i32
    %19 = tpu.dynamic_rotate %16 by %c15_i32_6 dim 2 : vector<2x16x16xf32>, i32 -> vector<2x16x16xf32>
    %20 = arith.addf %16, %16 : vector<2x16x16xf32>
    %c0_i32_7 = arith.constant 0 : i32
    %21 = vector.broadcast %c0_i32_7 : i32 to vector<2x16x16xi32>
    %22 = arith.cmpi sgt, %17, %21 : vector<2x16x16xi32>
    %cst_8 = arith.constant 0.000000e+00 : f32
    %23 = vector.broadcast %cst_8 : f32 to vector<2x16x16xf32>
    %24 = arith.select %22, %18, %23 : vector<2x16x16xi1>, vector<2x16x16xf32>
    %25 = arith.addf %20, %24 : vector<2x16x16xf32>
    %c15_i32_9 = arith.constant 15 : i32
    %26 = vector.broadcast %c15_i32_9 : i32 to vector<2x16x16xi32>
    %27 = arith.cmpi slt, %17, %26 : vector<2x16x16xi32>
    %cst_10 = arith.constant 0.000000e+00 : f32
    %28 = vector.broadcast %cst_10 : f32 to vector<2x16x16xf32>
    %29 = arith.select %27, %19, %28 : vector<2x16x16xi1>, vector<2x16x16xf32>
    %30 = arith.addf %25, %29 : vector<2x16x16xf32>
    %cst_11 = arith.constant 6.250000e-02 : f32
    %31 = vector.broadcast %cst_11 : f32 to vector<2x16x16xf32>
    %32 = arith.mulf %30, %31 : vector<2x16x16xf32>
    %cst_12 = arith.constant 9.99999996E-13 : f32
    %33 = vector.broadcast %cst_12 : f32 to vector<2x16x16xf32>
    %34 = arith.addf %32, %33 : vector<2x16x16xf32>
    %35 = math.sqrt %34 : vector<2x16x16xf32>
    %c0_13 = arith.constant 0 : index
    %c0_14 = arith.constant 0 : index
    %c0_15 = arith.constant 0 : index
    %c0_16 = arith.constant 0 : index
    %36 = vector.load %arg3[%c0_13, %c0_14, %c0_15, %c0_16] : memref<1x2x16x16xf32, #tpu.memory_space<vmem>>, vector<1x2x16x16xf32>
    %37 = vector.shape_cast %36 : vector<1x2x16x16xf32> to vector<2x16x16xf32>
    %38 = vector.shape_cast %35 : vector<2x16x16xf32> to vector<1x2x16x16xf32>
    tpu.vector_store %arg3[%c0_13, %c0_14, %c0_15, %c0_16], %38 {strides = array<i32>} : memref<1x2x16x16xf32, #tpu.memory_space<vmem>>, vector<1x2x16x16xf32>,
    return
  }
  func.func @transform_0(%arg0: i32, %arg1: i32) -> (i32, i32, i32, i32) {
    %c0_i32 = arith.constant 0 : i32
    %c0_i32_0 = arith.constant 0 : i32
    %c0_i32_1 = arith.constant 0 : i32
    return %arg0, %arg1, %c0_i32, %c0_i32_0 : i32, i32, i32, i32
  }
  func.func @transform_1(%arg0: i32, %arg1: i32) -> (i32, i32, i32, i32) {
    %c0_i32 = arith.constant 0 : i32
    %c0_i32_0 = arith.constant 0 : i32
    %c0_i32_1 = arith.constant 0 : i32
    return %arg0, %arg1, %c0_i32, %c0_i32_0 : i32, i32, i32, i32
  }
}

</mosaic_0001>

<llo_original>
// kernel: tpu_custom_call.1
$region0: #{tpu_custom_call.1}
  #allocation0 [shape = 'u32[]', space=smem, size = 0x4, offset = 0x4, fixed_abs, tag = 'smem constant byte address 0x4 - core index']
  #allocation1 [shape = 'u32[144,128]{1,0:T(1,128)}', space=vmem, size = 0x12000, scoped, tag = 'internal scratch']
  %s0 = inlined_call_operand.hbm [shape: f32[2,4,16,16], index: 0, kind: input, shape index: {}]
  %s1 = inlined_call_operand.hbm [shape: f32[2,4,16,16], index: 1, kind: output, shape index: {}]
  %s2 = sld [smem:[#allocation0]]
  $region41: #{tpu_custom_call.1} parent=0
    _
  %s4 = ssub.s32 1, %s2
  %s5 = scalar_select 0, %s4, %s2
  $region1: #{tpu_custom_call.1} parent=0
    #allocation2 [shape = 'u8[32768]{0}', space=vmem, size = 0x8000, scoped, tag = 'input window, operand 0']
    #allocation3 [shape = 's32[2]{0}', space=sflag, size = 0x8, scoped, tag = 'scoped memory for tpu_custom_call.1']
    #allocation4 [shape = 's32[2]{0}', space=sflag, size = 0x8, scoped, tag = 'scoped memory for tpu_custom_call.1']
    #allocation5 [shape = 'u8[32768]{0}', space=vmem, size = 0x8000, scoped, tag = 'output window, operand 0']
    %6 = vsyncpa [#allocation3], 0
    %s7 = scalar_lea.sflag [#allocation3], 1
    %8 = vsyncpa %s7, 0
    %9 = vsyncpa [#allocation4], 0
    %s10 = scalar_lea.sflag [#allocation4], 1
    %11 = vsyncpa %s10, 0
    loop: start=0, step=1, limit=6
    $region2: #{tpu_custom_call.1} parent=1 // loop_pre_header
      _
    $region3: #{tpu_custom_call.1} parent=1 // loop_header
      %s13 = sphi 0, %s17
      %p14 = scmp.ge.s32.totalorder %s13, 6
      %s20 = sphi 0, %s32
      %s21 = sphi 0, %s28
      %s22 = sphi 0, %s20
      %s23 = sphi 0, %s21
      %s24 = sphi 0, %s22
      %s25 = sphi 0, %s23
      %s37 = sphi 0, %s39
      %s40 = sphi 0, %s37
      %s41 = sphi 0, %s40
      %s57 = sphi 0, %s41
      %s65 = sphi 0, %s67
      %s68 = sphi 0, %s65
      %s69 = sphi 0, %s68
      %s85 = sphi 0, %s69
    $region4: #{tpu_custom_call.1} parent=1 // loop_header_branch
      %16 = sbr.rel (%p14) target = $region8
    $region5: #{tpu_custom_call.1} parent=1 // loop_body
      %s18 = ssub.s32 %s13, 1
      %s19 = ssub.s32 %s13, 2
      %s26 = sadd.s32 1, %s21
      %p27 = scmp.ge.s32.totalorder %s26, 2
      %s28 = scalar_select %p27, 0, %s26
      %s29 = sadd.s32 1, %s20
      %s30 = scalar_select %p27, %s29, %s20
      %p31 = scmp.ge.s32.totalorder %s30, 2
      %s32 = scalar_select %p31, 0, %s30
      %s33 = ssub.s32 %s20, %s32
      %s34 = ssub.s32 %s21, %s28
      %s35 = sor.u32 %s33, %s34
      %p36 = scmp.eq.s32.totalorder %s35, 0
      %s38 = sadd.s32 %s37, 1
      %s39 = scalar_select %p36, %s37, %s38
      %p42 = pneg %p36
      %p43 = scmp.eq.s32.totalorder %s13, 3
      %p44 = por %p42, %p43
      %p45 = scmp.ne.s32.totalorder %s37, %s40
      %p46 = scmp.eq.s32.totalorder %s13, 0
      %p47 = por %p45, %p46
      %p48 = scmp.ne.s32.totalorder %s37, %s40
      %p49 = scmp.eq.s32.totalorder %s18, 3
      %p50 = por %p48, %p49
      %p51 = scmp.ne.s32.totalorder %s40, %s41
      %p52 = scmp.eq.s32.totalorder %s18, 0
      %p53 = por %p51, %p52
      %p54 = scmp.ne.s32.totalorder %s40, %s41
      %p55 = scmp.eq.s32.totalorder %s19, 3
      %p56 = por %p54, %p55
      %p58 = scmp.ne.s32.totalorder %s41, %s57
      %p59 = scmp.eq.s32.totalorder %s19, 0
      %p60 = por %p58, %p59
      %s61 = ssub.s32 %s20, %s32
      %s62 = ssub.s32 %s21, %s28
      %s63 = sor.u32 %s61, %s62
      %p64 = scmp.eq.s32.totalorder %s63, 0
      %s66 = sadd.s32 %s65, 1
      %s67 = scalar_select %p64, %s65, %s66
      %p70 = pneg %p64
      %p71 = scmp.eq.s32.totalorder %s13, 3
      %p72 = por %p70, %p71
      %p73 = scmp.ne.s32.totalorder %s65, %s68
      %p74 = scmp.eq.s32.totalorder %s13, 0
      %p75 = por %p73, %p74
      %p76 = scmp.ne.s32.totalorder %s65, %s68
      %p77 = scmp.eq.s32.totalorder %s18, 3
      %p78 = por %p76, %p77
      %p79 = scmp.ne.s32.totalorder %s68, %s69
      %p80 = scmp.eq.s32.totalorder %s18, 0
      %p81 = por %p79, %p80
      %p82 = scmp.ne.s32.totalorder %s68, %s69
      %p83 = scmp.eq.s32.totalorder %s19, 3
      %p84 = por %p82, %p83
      %p86 = scmp.ne.s32.totalorder %s69, %s85
      %p87 = scmp.eq.s32.totalorder %s19, 0
      %p88 = por %p86, %p87
      %p89 = scmp.le.s32.totalorder 1, %s13
      %p90 = scmp.lt.s32.totalorder %s13, 5
      %p91 = pnand %p89, %p90
      %p92 = pneg %p91
      // Predicated region
      $region9: #{tpu_custom_call.1} parent=5 // pred_check
        _
      $region10: #{tpu_custom_call.1} parent=5 // pred_check_branch
        %94 = sbr.rel (%p91) target = $region12
      $region11: #{tpu_custom_call.1} parent=5 // pred_region
        %s95 = ssub.s32 %s13, 1
      $region12: #{tpu_custom_call.1} parent=5 // pred_fallthru
        _
      %p96 = scmp.lt.s32.totalorder %s13, 4
      // Predicated region
      $region13: #{tpu_custom_call.1} parent=5 // pred_check
        %p97 = pneg %p96
      $region14: #{tpu_custom_call.1} parent=5 // pred_check_branch
        %99 = sbr.rel (%p97) target = $region16
      $region15: #{tpu_custom_call.1} parent=5 // pred_region
        // Predicated region
        $region17: #{tpu_custom_call.1} parent=15 // pred_check
          %p100 = pneg %p47
        $region18: #{tpu_custom_call.1} parent=15 // pred_check_branch
          %102 = sbr.rel (%p100) target = $region20
        $region19: #{tpu_custom_call.1} parent=15 // pred_region
          %s103 = sand.u32 %s37, 1
          %s104 = scalar_lea.sflag [#allocation3], %s103
          %s105 = sand.u32 %s37, 1
          %s106 = smul.addr %s105, 32
          %s107 = scalar_lea.vmem [#allocation2], %s106
          %s108 = smul.u32 2, %s21
          %s110 = ssub.s32 512, 512
          %111 = vsyncadd %s104, %s110
          %s112 = smul.addr %s108, 2
          %s113 = smul.addr %s20, 8
          %s114 = sadd.s32 %s112, %s113
          %s115 = smul.addr %s114, 128
          %s116 = scalar_lea.hbm %s0, %s115
          %s117 = sshll.u32 %s107, 4
          %s118 = int_to_ptr.vmem [resolvable:$true] %s117
          %123 = dma.hbm_to_vmem [thread:$0]  %s116, 512, %s118, %s104, 128, 128, 8
        $region20: #{tpu_custom_call.1} parent=15 // pred_fallthru
          _
      $region16: #{tpu_custom_call.1} parent=5 // pred_fallthru
        _
      %p124 = scmp.le.s32.totalorder 1, %s13
      %p125 = scmp.lt.s32.totalorder %s13, 5
      %p126 = pnand %p124, %p125
      %p127 = pneg %p126
      // Predicated region
      $region21: #{tpu_custom_call.1} parent=5 // pred_check
        _
      $region22: #{tpu_custom_call.1} parent=5 // pred_check_branch
        %129 = sbr.rel (%p126) target = $region24
      $region23: #{tpu_custom_call.1} parent=5 // pred_region
        %s130 = ssub.s32 %s13, 1
        %s131 = sand.u32 %s40, 1
        %s132 = scalar_lea.sflag [#allocation3], %s131
        %s133 = sand.u32 %s40, 1
        %s134 = smul.addr %s133, 32
        %s135 = scalar_lea.vmem [#allocation2], %s134
        // Predicated region
        $region25: #{tpu_custom_call.1} parent=23 // pred_check
          %p136 = pneg %p53
        $region26: #{tpu_custom_call.1} parent=23 // pred_check_branch
          %138 = sbr.rel (%p136) target = $region28
        $region27: #{tpu_custom_call.1} parent=23 // pred_region
          %139 = dma.done %s132, 512
        $region28: #{tpu_custom_call.1} parent=23 // pred_fallthru
          _
        %s140 = sand.u32 %s40, 1
        %s141 = scalar_lea.sflag [#allocation3], %s140
        %s142 = sand.u32 %s40, 1
        %s143 = smul.addr %s142, 32
        %s144 = scalar_lea.vmem [#allocation2], %s143
        %p145 = pneg %p53
        %p146 = pneg %p50
        %p147 = pneg %p81
        %p148 = pneg %p78
        %s149 = sand.u32 %s68, 1
        %s150 = scalar_lea.sflag [#allocation4], %s149
        %s151 = sand.u32 %s68, 1
        %s152 = smul.addr %s151, 32
        %s153 = scalar_lea.vmem [#allocation5], %s152
        %s154 = smul.u32 2, %s23
        %s155 = smul.u32 2, %s23
        %v156 = vld [vmem:[%s135] sm:$0xff]
        %v157 = vld [vmem:[%s135 + $0x8] sm:$0xff]
        %v158 = vld [vmem:[%s135 + $0x10] sm:$0xff]
        %v159 = vld [vmem:[%s135 + $0x18] sm:$0xff]
        %v160 = vmul.f32 %v156, %v156
        %v161 = vmul.f32 %v157, %v157
        %v162 = vmul.f32 %v158, %v158
        %v163 = vmul.f32 %v159, %v159
        %v164 = vlaneseq
        %v165 = vshrl.u32 %v164, 7
        %v166 = vadd.s32 %v165, 8
        %v167 = vrot.slane %v160, 7
        %v168 = vrot.slane %v162, 7
        %v169 = vrot.slane %v161, 7
        %v170 = vrot.slane %v163, 7
        %vm171 = vcmp.lt.s32.totalorder %v165, 1
        %v172 = vsel %vm171, %v167, %v169
        %v173 = vsel %vm171, %v168, %v170
        %v174 = vsel %vm171, %v169, %v167
        %v175 = vsel %vm171, %v170, %v168
        %v176 = vrot.slane %v160, 1
        %v177 = vrot.slane %v162, 1
        %v178 = vrot.slane %v161, 1
        %v179 = vrot.slane %v163, 1
        %vm180 = vcmp.lt.s32.totalorder %v165, 7
        %v181 = vsel %vm180, %v176, %v178
        %v182 = vsel %vm180, %v177, %v179
        %v183 = vsel %vm180, %v178, %v176
        %v184 = vsel %vm180, %v179, %v177
        %v185 = vadd.f32 %v160, %v160
        %v186 = vadd.f32 %v161, %v161
        %v187 = vadd.f32 %v162, %v162
        %v188 = vadd.f32 %v163, %v163
        %vm189 = vcmp.gt.s32.totalorder %v165, 0
        %vm190 = vcmp.gt.s32.totalorder %v166, 0
        %v191 = vsel %vm189, %v174, 0.0
        %v192 = vsel %vm190, %v172, 0.0
        %v193 = vsel %vm189, %v175, 0.0
        %v194 = vsel %vm190, %v173, 0.0
        %v195 = vadd.f32 %v185, %v191
        %v196 = vadd.f32 %v186, %v192
        %v197 = vadd.f32 %v187, %v193
        %v198 = vadd.f32 %v188, %v194
        %vm199 = vcmp.lt.s32.totalorder %v165, 15
        %vm200 = vcmp.lt.s32.totalorder %v166, 15
        %v201 = vsel %vm199, %v181, 0.0
        %v202 = vsel %vm200, %v183, 0.0
        %v203 = vsel %vm199, %v182, 0.0
        %v204 = vsel %vm200, %v184, 0.0
        %v205 = vadd.f32 %v195, %v201
        %v206 = vadd.f32 %v196, %v202
        %v207 = vadd.f32 %v197, %v203
        %v208 = vadd.f32 %v198, %v204
        %v209 = vlaneseq
        %v210 = vand.u32 %v209, 127
        %vm211 = vcmask 1047680
        %212 = vrot.lane.b32.xlu0 %v205, 16
        %v213 = vpop.permute.xlu0 %212
        %v214 = vsel %vm211, %v213, %v205
        %215 = vrot.lane.b32.xlu0 %v206, 16
        %v216 = vpop.permute.xlu0 %215
        %v217 = vsel %vm211, %v216, %v206
        %218 = vrot.lane.b32.xlu0 %v207, 16
        %v219 = vpop.permute.xlu0 %218
        %v220 = vsel %vm211, %v219, %v207
        %221 = vrot.lane.b32.xlu0 %v208, 16
        %v222 = vpop.permute.xlu0 %221
        %v223 = vsel %vm211, %v222, %v208
        %224 = vrot.lane.b32.xlu0 %v214, 16
        %v225 = vpop.permute.xlu0 %224
        %226 = vrot.lane.b32.xlu0 %v217, 16
        %v227 = vpop.permute.xlu0 %226
        %228 = vrot.lane.b32.xlu0 %v220, 16
        %v229 = vpop.permute.xlu0 %228
        %230 = vrot.lane.b32.xlu0 %v223, 16
        %v231 = vpop.permute.xlu0 %230
        %v232 = vsel %vm211, %v225, %v205
        %v233 = vsel %vm211, %v227, %v206
        %v234 = vsel %vm211, %v229, %v207
        %v235 = vsel %vm211, %v231, %v208
        %v236 = vadd.f32 %v205, %v205
        %v237 = vadd.f32 %v206, %v206
        %v238 = vadd.f32 %v207, %v207
        %v239 = vadd.f32 %v208, %v208
        %vm240 = vcmp.gt.s32.totalorder %v210, 0
        %245 = vrot.lane.b32.xlu0 %v232, 113
        %v246 = vpop.permute.xlu0 %245
        %247 = vrot.lane.b32.xlu0 %v233, 113
        %v248 = vpop.permute.xlu0 %247
        %249 = vrot.lane.b32.xlu0 %v234, 113
        %v250 = vpop.permute.xlu0 %249
        %251 = vrot.lane.b32.xlu0 %v235, 113
        %v252 = vpop.permute.xlu0 %251
        %v257 = vsel %vm240, %v246, 0.0
        %v258 = vsel %vm240, %v248, 0.0
        %v259 = vsel %vm240, %v250, 0.0
        %v260 = vsel %vm240, %v252, 0.0
        %v261 = vadd.f32 %v236, %v257
        %v262 = vadd.f32 %v237, %v258
        %v263 = vadd.f32 %v238, %v259
        %v264 = vadd.f32 %v239, %v260
        %vm265 = vcmp.lt.s32.totalorder %v210, 15
        %266 = vrot.lane.b32.xlu0 %v232, 127
        %v267 = vpop.permute.xlu0 %266
        %268 = vrot.lane.b32.xlu0 %v233, 127
        %v269 = vpop.permute.xlu0 %268
        %270 = vrot.lane.b32.xlu0 %v234, 127
        %v271 = vpop.permute.xlu0 %270
        %272 = vrot.lane.b32.xlu0 %v235, 127
        %v273 = vpop.permute.xlu0 %272
        %v278 = vsel %vm265, %v267, 0.0
        %v279 = vsel %vm265, %v269, 0.0
        %v280 = vsel %vm265, %v271, 0.0
        %v281 = vsel %vm265, %v273, 0.0
        %v282 = vadd.f32 %v261, %v278
        %v283 = vadd.f32 %v262, %v279
        %v284 = vadd.f32 %v263, %v280
        %v285 = vadd.f32 %v264, %v281
        %v286 = vmul.f32 %v282, 0.0625
        %v287 = vmul.f32 %v283, 0.0625
        %v288 = vmul.f32 %v284, 0.0625
        %v289 = vmul.f32 %v285, 0.0625
        %v290 = vadd.f32 %v286, 1e-12
        %v291 = vadd.f32 %v287, 1e-12
        %v292 = vadd.f32 %v288, 1e-12
        %v293 = vadd.f32 %v289, 1e-12
        %v294 = vrsqrt.pop %v290
        %v295 = vmul.f32 %v290, %v294
        %vm296 = vcmp.eq.f32.partialorder %v290, inf
        %v297 = vsel %vm296, %v290, %v295
        %vm298 = vcmp.eq.f32.partialorder %v290, 0.0
        %v299 = vand.u32 %v290, 2147483648
        %v300 = vsel %vm298, %v299, %v297
        %v301 = vrsqrt.pop %v291
        %v302 = vmul.f32 %v291, %v301
        %vm303 = vcmp.eq.f32.partialorder %v291, inf
        %v304 = vsel %vm303, %v291, %v302
        %vm305 = vcmp.eq.f32.partialorder %v291, 0.0
        %v306 = vand.u32 %v291, 2147483648
        %v307 = vsel %vm305, %v306, %v304
        %v308 = vrsqrt.pop %v292
        %v309 = vmul.f32 %v292, %v308
        %vm310 = vcmp.eq.f32.partialorder %v292, inf
        %v311 = vsel %vm310, %v292, %v309
        %vm312 = vcmp.eq.f32.partialorder %v292, 0.0
        %v313 = vand.u32 %v292, 2147483648
        %v314 = vsel %vm312, %v313, %v311
        %v315 = vrsqrt.pop %v293
        %v316 = vmul.f32 %v293, %v315
        %vm317 = vcmp.eq.f32.partialorder %v293, inf
        %v318 = vsel %vm317, %v293, %v316
        %vm319 = vcmp.eq.f32.partialorder %v293, 0.0
        %v320 = vand.u32 %v293, 2147483648
        %v321 = vsel %vm319, %v320, %v318
        %vm322 = vcmask 130048
        %323 = vst.msk [vmem:[%s153] sm:$0xff] %vm322, %v300
        %324 = vst.msk [vmem:[%s153 + $0x8] sm:$0xff] %vm322, %v307
        %325 = vst.msk [vmem:[%s153 + $0x10] sm:$0xff] %vm322, %v314
        %326 = vst.msk [vmem:[%s153 + $0x18] sm:$0xff] %vm322, %v321
        %s327 = sand.u32 %s68, 1
        %s328 = scalar_lea.sflag [#allocation4], %s327
        %s329 = sand.u32 %s68, 1
        %s330 = smul.addr %s329, 32
        %s331 = scalar_lea.vmem [#allocation5], %s330
        // Predicated region
        $region29: #{tpu_custom_call.1} parent=23 // pred_check
          %p332 = pneg %p78
        $region30: #{tpu_custom_call.1} parent=23 // pred_check_branch
          %334 = sbr.rel (%p332) target = $region32
        $region31: #{tpu_custom_call.1} parent=23 // pred_region
          %s335 = smul.u32 2, %s23
          %s337 = ssub.s32 512, 512
          %338 = vsyncadd %s328, %s337
          %s339 = smul.addr %s335, 2
          %s340 = smul.addr %s22, 8
          %s341 = sadd.s32 %s339, %s340
          %s342 = smul.addr %s341, 128
          %s343 = scalar_lea.hbm %s1, %s342
          %s344 = sshll.u32 %s331, 4
          %s345 = int_to_ptr.vmem [resolvable:$true] %s344
          %350 = dma.vmem_to_hbm [thread:$0]  %s345, 512, %s343, %s328, 128, 128, 8
        $region32: #{tpu_custom_call.1} parent=23 // pred_fallthru
          _
      $region24: #{tpu_custom_call.1} parent=5 // pred_fallthru
        _
      %p351 = scmp.le.s32.totalorder 2, %s13
      // Predicated region
      $region33: #{tpu_custom_call.1} parent=5 // pred_check
        %p352 = pneg %p351
      $region34: #{tpu_custom_call.1} parent=5 // pred_check_branch
        %354 = sbr.rel (%p352) target = $region36
      $region35: #{tpu_custom_call.1} parent=5 // pred_region
        %s355 = ssub.s32 %s13, 2
        // Predicated region
        $region37: #{tpu_custom_call.1} parent=35 // pred_check
          %p356 = pneg %p84
        $region38: #{tpu_custom_call.1} parent=35 // pred_check_branch
          %358 = sbr.rel (%p356) target = $region40
        $region39: #{tpu_custom_call.1} parent=35 // pred_region
          %s359 = sand.u32 %s69, 1
          %s360 = scalar_lea.sflag [#allocation4], %s359
          %s361 = sand.u32 %s69, 1
          %s362 = smul.addr %s361, 32
          %s363 = scalar_lea.vmem [#allocation5], %s362
          %364 = dma.done %s360, 512
        $region40: #{tpu_custom_call.1} parent=35 // pred_fallthru
          _
      $region36: #{tpu_custom_call.1} parent=5 // pred_fallthru
        _
    $region6: #{tpu_custom_call.1} parent=1 // loop_footer
      %s17 = sadd.s32 1, %s13
    $region7: #{tpu_custom_call.1} parent=1 // loop_footer_branch
      %12 = sbr.rel target = $region3
    $region8: #{tpu_custom_call.1} parent=1 // loop_exit
      _
    %365 = vsyncpa [#allocation3], 1
    %s366 = scalar_lea.sflag [#allocation3], 1
    %367 = vsyncpa %s366, 1
    %368 = vsyncpa [#allocation4], 1
    %s369 = scalar_lea.sflag [#allocation4], 1
    %370 = vsyncpa %s369, 1

</llo_original>
